<compile_context>
chip_gen: v7x
topology: tpu7x:2x2x1
jax: 0.10.0
libtpu: 0.0.40
codegen_flags: <defaults>
</compile_context>

<pallas_src>
import jax
import jax.numpy as jnp
from jax.experimental import pallas as pl
from jax.experimental.pallas import tpu as pltpu

FEAT = 4
N_LAYERS = 6
GROUPS = 128 // FEAT            # 32 batch rows per 128-lane vector
TARGET_TM = 2048                # 2048 x 128 f32 block = 1 MiB per DMA


def _affine_kernel(bd_ref, bias_ref, x_ref, o_ref):
    """o = x @ BD + bias_tile  (BD = block-diag of 32 copies of W_eff).

    bd_ref  : VMEM (128, 128) f32   block-diagonal folded weight (resident).
    bias_ref: VMEM (1, 128)   f32   bias tiled across the 32 lane-groups.
    x_ref   : VMEM (tm, 128)        activations, natural row-major layout.
    o_ref   : VMEM (tm, 128)        output tile, same layout (lane-dense).
    """
    x = x_ref[...].astype(jnp.float32)
    y = jnp.dot(x, bd_ref[...], preferred_element_type=jnp.float32)
    o_ref[...] = (y + bias_ref[...]).astype(o_ref.dtype)


def _round_up(a, m):
    return (a + m - 1) // m * m


@jax.jit
def mlp_chain(x, weights, biases):
    """x: [B, 4]; weights: 6 x [4, 4] (PyTorch [out, in]); biases: 6 x [4]."""
    B, F = x.shape
    assert F == FEAT and len(weights) == N_LAYERS and len(biases) == N_LAYERS

    # ---- Fold the six affine layers into one (exact, done once in JAX). ----
    # PyTorch: h = h @ W_l.T + b_l  =>  W_eff = W1.T @ W2.T @ ... @ W6.T
    #                                   b_eff = ((b1 @ W2.T + b2) @ W3.T + ...)
    w_eff = jnp.asarray(weights[0], jnp.float32).T            # [in, out]
    b_eff = jnp.asarray(biases[0], jnp.float32)
    for w, b in zip(weights[1:], biases[1:]):
        wt = jnp.asarray(w, jnp.float32).T
        w_eff = w_eff @ wt
        b_eff = b_eff @ wt + jnp.asarray(b, jnp.float32)

    # 128x128 block-diagonal of W_eff and a lane-tiled bias (tiny, VMEM-resident).
    bd = jnp.kron(jnp.eye(GROUPS, dtype=jnp.float32), w_eff)      # (128, 128)
    bias_tile = jnp.tile(b_eff, GROUPS).reshape(1, 128)           # (1, 128)

    # ---- Free lane-dense layout: row-major [B,4] -> [M,128] (pure view). ----
    # Lane l = 4*g + f of row m holds batch row m*32 + g, feature f.
    M = pl.cdiv(B, GROUPS)
    M8 = _round_up(M, 8)
    if M8 <= 32:
        tm = M8                                          # tiny batch: 1 block
    else:
        tm = min(TARGET_TM, _round_up(pl.cdiv(M8, 4), 8))  # >=4 blocks (megacore)
    M_pad = _round_up(M8, tm)
    b_pad = M_pad * GROUPS

    # Stream activations in their native dtype; only the small tail is padded.
    xr = jnp.pad(x, ((0, b_pad - B), (0, 0))).reshape(M_pad, 128)

    out = pl.pallas_call(
        _affine_kernel,
        out_shape=jax.ShapeDtypeStruct((M_pad, 128), x.dtype),
        grid=(M_pad // tm,),
        in_specs=[
            pl.BlockSpec((128, 128), lambda i: (0, 0)),   # block-diag weights
            pl.BlockSpec((1, 128), lambda i: (0, 0)),     # tiled bias
            pl.BlockSpec((tm, 128), lambda i: (i, 0)),    # activations
        ],
        out_specs=pl.BlockSpec((tm, 128), lambda i: (i, 0)),
        compiler_params=pltpu.CompilerParams(
            dimension_semantics=("parallel",),
        ),
        cost_estimate=pl.CostEstimate(
            flops=2 * M_pad * 128 * 128,
            transcendentals=0,
            bytes_accessed=2 * M_pad * 128 * x.dtype.itemsize
            + (128 * 128 + 128) * 4,
        ),
    )(bd, bias_tile, xr)

    # Free reshape back to [b_pad, 4]; padded rows (bias-only garbage) sliced off.
    return out.reshape(b_pad, FEAT)[:B]


def mlp_chain_ref(x, weights, biases):
    """Pure-JAX reference matching torch.nn.Linear chaining (layer by layer)."""
    h = x.astype(jnp.float32)
    for w, b in zip(weights, biases):
        h = h @ jnp.asarray(w, jnp.float32).T + jnp.asarray(b, jnp.float32)
    return h.astype(x.dtype)


if __name__ == "__main__":
    key = jax.random.PRNGKey(0)
    k_x, k_p = jax.random.split(key)

    # Deterministic params mimicking nn.Linear's U(-1/sqrt(in), 1/sqrt(in)).
    bound = 1.0 / (FEAT ** 0.5)
    weights, biases = [], []
    pk = k_p
    for _ in range(N_LAYERS):
        pk, kw, kb = jax.random.split(pk, 3)
        weights.append(jax.random.uniform(kw, (FEAT, FEAT), jnp.float32,
                                          minval=-bound, maxval=bound))
        biases.append(jax.random.uniform(kb, (FEAT,), jnp.float32,
                                         minval=-bound, maxval=bound))

    # Small batch consistent with the module (4 input features).
    B = 8
    x = jax.random.normal(k_x, (B, FEAT), dtype=jnp.float32)
    out = mlp_chain(x, weights, biases)
    jax.block_until_ready(out)
    ref = mlp_chain_ref(x, weights, biases)
    assert out.shape == (B, FEAT)
    assert jnp.allclose(out, ref, atol=3e-5, rtol=3e-5), "mismatch vs reference (B=8)"

    # Also exercise the multi-block (grid > 1) path.
    B2 = 2048
    x2 = jax.random.normal(jax.random.PRNGKey(1), (B2, FEAT), dtype=jnp.float32)
    out2 = mlp_chain(x2, weights, biases)
    jax.block_until_ready(out2)
    ref2 = mlp_chain_ref(x2, weights, biases)
    assert jnp.allclose(out2, ref2, atol=3e-5, rtol=3e-5), "mismatch vs reference (B=2048)"

    print("KERNEL_OK")
</pallas_src>

<mosaic_0001>
module attributes {stable_mosaic.version = 11 : i64} {
  func.func @_affine_kernel(%arg0: i32, %arg1: memref<128x128xf32, #tpu.memory_space<vmem>>, %arg2: memref<1x128xf32, #tpu.memory_space<vmem>>, %arg3: memref<8x128xf32, #tpu.memory_space<vmem>>, %arg4: memref<8x128xf32, #tpu.memory_space<vmem>>) attributes {dimension_semantics = [#tpu.dimension_semantics<parallel>], iteration_bounds = array<i64: 1>, scalar_prefetch = 0 : i64, scratch_operands = 0 : i64, tpu.core_type = #tpu.core_type<tc>, window_params = [{pipeline_mode = #tpu.pipeline_mode<synchronous>, transform_indices = @transform_0, window_bounds = array<i64: 128, 128>}, {pipeline_mode = #tpu.pipeline_mode<synchronous>, transform_indices = @transform_1, window_bounds = array<i64: 1, 128>}, {transform_indices = @transform_2, window_bounds = array<i64: 8, 128>}, {transform_indices = @transform_3, window_bounds = array<i64: 8, 128>}]} {
    %c0 = arith.constant 0 : index
    %c0_0 = arith.constant 0 : index
    %0 = vector.load %arg3[%c0, %c0_0] : memref<8x128xf32, #tpu.memory_space<vmem>>, vector<8x128xf32>
    %c0_1 = arith.constant 0 : index
    %c0_2 = arith.constant 0 : index
    %1 = vector.load %arg1[%c0_1, %c0_2] : memref<128x128xf32, #tpu.memory_space<vmem>>, vector<128x128xf32>
    %cst = arith.constant dense<0.000000e+00> : vector<8x128xf32>
    %2 = tpu.matmul %0, %1, %cst {dimension_numbers = #tpu.dot_dimension_numbers<[1], [0], [0], [1], [0, 0, 1, 1], [], []>} : vector<8x128xf32>, vector<128x128xf32>, vector<8x128xf32> -> vector<8x128xf32>
    %c0_3 = arith.constant 0 : index
    %c0_4 = arith.constant 0 : index
    %3 = vector.load %arg2[%c0_3, %c0_4] : memref<1x128xf32, #tpu.memory_space<vmem>>, vector<1x128xf32>
    %4 = vector.broadcast %3 : vector<1x128xf32> to vector<8x128xf32>
    %5 = arith.addf %2, %4 : vector<8x128xf32>
    %c0_5 = arith.constant 0 : index
    %c0_6 = arith.constant 0 : index
    %6 = vector.load %arg4[%c0_5, %c0_6] : memref<8x128xf32, #tpu.memory_space<vmem>>, vector<8x128xf32>
    tpu.vector_store %arg4[%c0_5, %c0_6], %5 {strides = array<i32>} : memref<8x128xf32, #tpu.memory_space<vmem>>, vector<8x128xf32>,
    return
  }
  func.func @transform_0(%arg0: i32) -> (i32, i32) {
    %c0_i32 = arith.constant 0 : i32
    %c0_i32_0 = arith.constant 0 : i32
    %c0_i32_1 = arith.constant 0 : i32
    return %c0_i32, %c0_i32_0 : i32, i32
  }
  func.func @transform_1(%arg0: i32) -> (i32, i32) {
    %c0_i32 = arith.constant 0 : i32
    %c0_i32_0 = arith.constant 0 : i32
    %c0_i32_1 = arith.constant 0 : i32
    return %c0_i32, %c0_i32_0 : i32, i32
  }
  func.func @transform_2(%arg0: i32) -> (i32, i32) {
    %c0_i32 = arith.constant 0 : i32
    %c0_i32_0 = arith.constant 0 : i32
    return %arg0, %c0_i32 : i32, i32
  }
  func.func @transform_3(%arg0: i32) -> (i32, i32) {
    %c0_i32 = arith.constant 0 : i32
    %c0_i32_0 = arith.constant 0 : i32
    return %arg0, %c0_i32 : i32, i32
  }
}

</mosaic_0001>

<llo_original>
// kernel: tile.8
$region0: #{tile.8}
  #allocation0 [shape = 's32[1]{0}', space=sflag, size = 0x4, scoped, tag = 'scoped memory for tile.8']
  %s0 = inlined_call_operand.vmem [shape: f32[4], index: 0, kind: input, shape index: {}]
  %s1 = inlined_call_operand.vmem [shape: f32[32,4], index: 1, kind: output, shape index: {}]
  // Predicated region
  $region2: #{tile.8} parent=0 // pred_check
    _
  $region3: #{tile.8} parent=0 // pred_check_branch
    %3 = sbr.rel (0) target = $region5
  $region4: #{tile.8} parent=0 // pred_region
    _
  $region5: #{tile.8} parent=0 // pred_fallthru
    _
  %v4 = vld [vmem:[%s0] ss:$0 sm:$0xff]
  %5 = vst [vmem:[%s1] sm:$0xff] %v4
  %s6 = scalar_lea.vmem %s1, 8
  %7 = vst [vmem:[%s6] sm:$0xff] %v4
  %s8 = scalar_lea.vmem %s1, 16
  %9 = vst [vmem:[%s8] sm:$0xff] %v4
  %s10 = scalar_lea.vmem %s1, 24
  %11 = vst [vmem:[%s10] sm:$0xff] %v4

// kernel: tile.9
$region0: #{tile.9}
  %s0 = inlined_call_operand.vmem [shape: f32[32,4], index: 0, kind: input, shape index: {}]
  %s1 = inlined_call_operand.vmem [shape: f32[1,128], index: 1, kind: output, shape index: {}]
  $region1: #{tile.9} parent=0
    #allocation0 [shape = 'u8[4096]{0}', space=vmem, size = 0x1000, scoped, tag = 'scoped mem for output reshape']
    %v2 = vld [vmem:[%s0] sm:$0x1]
    %vm3 = vcmask 31744
    %4 = vst.msk [vmem:[#allocation0] sm:$0x1] %vm3, %v2
    %s5 = scalar_lea.vmem %s0, 31
    %v6 = vld [vmem:[%s5] sm:$0x1]
    %7 = vrot.lane.b32.xlu0 %v6, 124
    %v8 = vpop.permute.xlu0 %7
    %vm9 = vcmask 1048544
    %10 = vst.msk [vmem:[#allocation0] sm:$0x1] %vm9, %v8
    %s11 = scalar_lea.vmem %s0, 30
    %v12 = vld [vmem:[%s11] sm:$0x1]
    %13 = vrot.lane.b32.xlu0 %v12, 120
    %v14 = vpop.permute.xlu0 %13
    %vm15 = vcmask 1015744
    %16 = vst.msk [vmem:[#allocation0] sm:$0x1] %vm15, %v14
    %s17 = scalar_lea.vmem %s0, 29
    %v18 = vld [vmem:[%s17] sm:$0x1]
    %19 = vrot.lane.b32.xlu0 %v18, 116
    %v20 = vpop.permute.xlu0 %19
    %vm21 = vcmask 982944
    %22 = vst.msk [vmem:[#allocation0] sm:$0x1] %vm21, %v20
    %s23 = scalar_lea.vmem %s0, 28
    %v24 = vld [vmem:[%s23] sm:$0x1]
    %25 = vrot.lane.b32.xlu0 %v24, 112
    %v26 = vpop.permute.xlu0 %25
    %vm27 = vcmask 950144
    %28 = vst.msk [vmem:[#allocation0] sm:$0x1] %vm27, %v26
    %s29 = scalar_lea.vmem %s0, 27
    %v30 = vld [vmem:[%s29] sm:$0x1]
    %31 = vrot.lane.b32.xlu0 %v30, 108
    %v32 = vpop.permute.xlu0 %31
    %vm33 = vcmask 917344
    %34 = vst.msk [vmem:[#allocation0] sm:$0x1] %vm33, %v32
    %s35 = scalar_lea.vmem %s0, 26
    %v36 = vld [vmem:[%s35] sm:$0x1]
    %37 = vrot.lane.b32.xlu0 %v36, 104
    %v38 = vpop.permute.xlu0 %37
    %vm39 = vcmask 884544
    %40 = vst.msk [vmem:[#allocation0] sm:$0x1] %vm39, %v38
    %s41 = scalar_lea.vmem %s0, 25
    %v42 = vld [vmem:[%s41] sm:$0x1]
    %43 = vrot.lane.b32.xlu0 %v42, 100
    %v44 = vpop.permute.xlu0 %43
    %vm45 = vcmask 851744
    %46 = vst.msk [vmem:[#allocation0] sm:$0x1] %vm45, %v44
    %s47 = scalar_lea.vmem %s0, 24
    %v48 = vld [vmem:[%s47] sm:$0x1]
    %49 = vrot.lane.b32.xlu0 %v48, 96
    %v50 = vpop.permute.xlu0 %49
    %vm51 = vcmask 818944
    %52 = vst.msk [vmem:[#allocation0] sm:$0x1] %vm51, %v50
    %s53 = scalar_lea.vmem %s0, 23
    %v54 = vld [vmem:[%s53] sm:$0x1]
    %55 = vrot.lane.b32.xlu0 %v54, 92
    %v56 = vpop.permute.xlu0 %55
    %vm57 = vcmask 786144
    %58 = vst.msk [vmem:[#allocation0] sm:$0x1] %vm57, %v56
    %s59 = scalar_lea.vmem %s0, 22
    %v60 = vld [vmem:[%s59] sm:$0x1]
    %61 = vrot.lane.b32.xlu0 %v60, 88
    %v62 = vpop.permute.xlu0 %61
    %vm63 = vcmask 753344
    %64 = vst.msk [vmem:[#allocation0] sm:$0x1] %vm63, %v62
    %s65 = scalar_lea.vmem %s0, 21
    %v66 = vld [vmem:[%s65] sm:$0x1]
    %67 = vrot.lane.b32.xlu0 %v66, 84
    %v68 = vpop.permute.xlu0 %67
    %vm69 = vcmask 720544
    %70 = vst.msk [vmem:[#allocation0] sm:$0x1] %vm69, %v68
    %s71 = scalar_lea.vmem %s0, 20
    %v72 = vld [vmem:[%s71] sm:$0x1]
    %73 = vrot.lane.b32.xlu0 %v72, 80
    %v74 = vpop.permute.xlu0 %73
    %vm75 = vcmask 687744
    %76 = vst.msk [vmem:[#allocation0] sm:$0x1] %vm75, %v74
    %s77 = scalar_lea.vmem %s0, 19
    %v78 = vld [vmem:[%s77] sm:$0x1]
    %79 = vrot.lane.b32.xlu0 %v78, 76
    %v80 = vpop.permute.xlu0 %79
    %vm81 = vcmask 654944
    %82 = vst.msk [vmem:[#allocation0] sm:$0x1] %vm81, %v80
    %s83 = scalar_lea.vmem %s0, 18
    %v84 = vld [vmem:[%s83] sm:$0x1]
    %85 = vrot.lane.b32.xlu0 %v84, 72
    %v86 = vpop.permute.xlu0 %85
    %vm87 = vcmask 622144
    %88 = vst.msk [vmem:[#allocation0] sm:$0x1] %vm87, %v86
    %s89 = scalar_lea.vmem %s0, 17
    %v90 = vld [vmem:[%s89] sm:$0x1]
    %91 = vrot.lane.b32.xlu0 %v90, 68
    %v92 = vpop.permute.xlu0 %91
    %vm93 = vcmask 589344
    %94 = vst.msk [vmem:[#allocation0] sm:$0x1] %vm93, %v92
    %s95 = scalar_lea.vmem %s0, 16
    %v96 = vld [vmem:[%s95] sm:$0x1]
    %97 = vrot.lane.b32.xlu0 %v96, 64
    %v98 = vpop.permute.xlu0 %97
    %vm99 = vcmask 556544
    %100 = vst.msk [vmem:[#allocation0] sm:$0x1] %vm99, %v98
    %s101 = scalar_lea.vmem %s0, 15
    %v102 = vld [vmem:[%s101] sm:$0x1]
    %103 = vrot.lane.b32.xlu0 %v102, 60
    %v104 = vpop.permute.xlu0 %103
    %vm105 = vcmask 523744
    %106 = vst.msk [vmem:[#allocation0] sm:$0x1] %vm105, %v104
    %s107 = scalar_lea.vmem %s0, 14
    %v108 = vld [vmem:[%s107] sm:$0x1]
    %109 = vrot.lane.b32.xlu0 %v108, 56
    %v110 = vpop.permute.xlu0 %109
    %vm111 = vcmask 490944
    %112 = vst.msk [vmem:[#allocation0] sm:$0x1] %vm111, %v110
    %s113 = scalar_lea.vmem %s0, 13
    %v114 = vld [vmem:[%s113] sm:$0x1]
    %115 = vrot.lane.b32.xlu0 %v114, 52
    %v116 = vpop.permute.xlu0 %115
    %vm117 = vcmask 458144
    %118 = vst.msk [vmem:[#allocation0] sm:$0x1] %vm117, %v116
    %s119 = scalar_lea.vmem %s0, 12
    %v120 = vld [vmem:[%s119] sm:$0x1]
    %121 = vrot.lane.b32.xlu0 %v120, 48
    %v122 = vpop.permute.xlu0 %121
    %vm123 = vcmask 425344
    %124 = vst.msk [vmem:[#allocation0] sm:$0x1] %vm123, %v122
    %s125 = scalar_lea.vmem %s0, 11
    %v126 = vld [vmem:[%s125] sm:$0x1]
    %127 = vrot.lane.b32.xlu0 %v126, 44
    %v128 = vpop.permute.xlu0 %127
    %vm129 = vcmask 392544
    %130 = vst.msk [vmem:[#allocation0] sm:$0x1] %vm129, %v128
    %s131 = scalar_lea.vmem %s0, 10
    %v132 = vld [vmem:[%s131] sm:$0x1]
    %133 = vrot.lane.b32.xlu0 %v132, 40
    %v134 = vpop.permute.xlu0 %133
    %vm135 = vcmask 359744
    %136 = vst.msk [vmem:[#allocation0] sm:$0x1] %vm135, %v134
    %s137 = scalar_lea.vmem %s0, 9
    %v138 = vld [vmem:[%s137] sm:$0x1]
    %139 = vrot.lane.b32.xlu0 %v138, 36
    %v140 = vpop.permute.xlu0 %139
    %vm141 = vcmask 326944
    %142 = vst.msk [vmem:[#allocation0] sm:$0x1] %vm141, %v140
    %s143 = scalar_lea.vmem %s0, 8
    %v144 = vld [vmem:[%s143] sm:$0x1]
    %145 = vrot.lane.b32.xlu0 %v144, 32
    %v146 = vpop.permute.xlu0 %145
    %vm147 = vcmask 294144
    %148 = vst.msk [vmem:[#allocation0] sm:$0x1] %vm147, %v146
    %s149 = scalar_lea.vmem %s0, 7
    %v150 = vld [vmem:[%s149] sm:$0x1]
    %151 = vrot.lane.b32.xlu0 %v150, 28
    %v152 = vpop.permute.xlu0 %151
    %vm153 = vcmask 261344
    %154 = vst.msk [vmem:[#allocation0] sm:$0x1] %vm153, %v152
    %s155 = scalar_lea.vmem %s0, 6
    %v156 = vld [vmem:[%s155] sm:$0x1]
    %157 = vrot.lane.b32.xlu0 %v156, 24
    %v158 = vpop.permute.xlu0 %157
    %vm159 = vcmask 228544
    %160 = vst.msk [vmem:[#allocation0] sm:$0x1] %vm159, %v158
    %s161 = scalar_lea.vmem %s0, 5
    %v162 = vld [vmem:[%s161] sm:$0x1]
    %163 = vrot.lane.b32.xlu0 %v162, 20
    %v164 = vpop.permute.xlu0 %163
    %vm165 = vcmask 195744
    %166 = vst.msk [vmem:[#allocation0] sm:$0x1] %vm165, %v164
    %s167 = scalar_lea.vmem %s0, 4
    %v168 = vld [vmem:[%s167] sm:$0x1]
    %169 = vrot.lane.b32.xlu0 %v168, 16
    %v170 = vpop.permute.xlu0 %169
    %vm171 = vcmask 162944
    %172 = vst.msk [vmem:[#allocation0] sm:$0x1] %vm171, %v170
    %s173 = scalar_lea.vmem %s0, 3
    %v174 = vld [vmem:[%s173] sm:$0x1]
    %175 = vrot.lane.b32.xlu0 %v174, 12
    %v176 = vpop.permute.xlu0 %175
    %vm177 = vcmask 130144
    %178 = vst.msk [vmem:[#allocation0] sm:$0x1] %vm177, %v176
    %s179 = scalar_lea.vmem %s0, 2
    %v180 = vld [vmem:[%s179] sm:$0x1]
    %181 = vrot.lane.b32.xlu0 %v180, 8
    %v182 = vpop.permute.xlu0 %181
    %vm183 = vcmask 97344
    %184 = vst.msk [vmem:[#allocation0] sm:$0x1] %vm183, %v182
    %s185 = scalar_lea.vmem %s0, 1
    %v186 = vld [vmem:[%s185] sm:$0x1]
    %187 = vrot.lane.b32.xlu0 %v186, 4
    %v188 = vpop.permute.xlu0 %187
    %vm189 = vcmask 64544
    %190 = vst.msk [vmem:[#allocation0] sm:$0x1] %vm189, %v188
    %s192 = sshllo.u32 0, 1
    %v194 = vld [vmem:[#allocation0] sm:%s192]
    %s195 = sshllo.u32 0, 1
    %196 = vst [vmem:[%s1] sm:%s195] %v194

// kernel: mlp_chain.1
$region0: #{mlp_chain.1}
  #allocation0 [shape = 'u32[]', space=smem, size = 0x4, offset = 0x4, fixed_abs, tag = 'smem constant byte address 0x4 - core index']
  #allocation1 [shape = 'u32[144,128]{1,0:T(1,128)}', space=vmem, size = 0x12000, scoped, tag = 'internal scratch']
  %s0 = inlined_call_operand.vmem [shape: f32[128,128], index: 0, kind: input, shape index: {}]
  %s1 = inlined_call_operand.vmem [shape: f32[1,128], index: 1, kind: input, shape index: {}]
  %s2 = inlined_call_operand.vmem [shape: f32[8,128], index: 2, kind: input, shape index: {}]
  %s3 = inlined_call_operand.vmem [shape: f32[8,128], index: 3, kind: output, shape index: {}]
  %s4 = sld [smem:[#allocation0]]
  $region22: #{mlp_chain.1} parent=0
    _
  %s6 = ssub.s32 1, %s4
  %s7 = scalar_select 0, %s6, %s4
  // Predicated region
  $region2: #{mlp_chain.1} parent=0 // pred_check
    _
  $region3: #{mlp_chain.1} parent=0 // pred_check_branch
    %9 = sbr.rel (0) target = $region5
  $region4: #{mlp_chain.1} parent=0 // pred_region
    _
  $region5: #{mlp_chain.1} parent=0 // pred_fallthru
    _
  // Predicated region
  $region6: #{mlp_chain.1} parent=0 // pred_check
    _
  $region7: #{mlp_chain.1} parent=0 // pred_check_branch
    %11 = sbr.rel (0) target = $region9
  $region8: #{mlp_chain.1} parent=0 // pred_region
    _
  $region9: #{mlp_chain.1} parent=0 // pred_fallthru
    _
  // Predicated region
  $region10: #{mlp_chain.1} parent=0 // pred_check
    _
  $region11: #{mlp_chain.1} parent=0 // pred_check_branch
    %13 = sbr.rel (0) target = $region13
  $region12: #{mlp_chain.1} parent=0 // pred_region
    _
  $region13: #{mlp_chain.1} parent=0 // pred_fallthru
    _
  %v14 = vld [vmem:[%s2] sm:$0xff]
  %v15 = vld [vmem:[%s0] sm:$0xff]
  %v16 = vld [vmem:[%s0 + $0x8] sm:$0xff]
  %v17 = vld [vmem:[%s0 + $0x10] sm:$0xff]
  %v18 = vld [vmem:[%s0 + $0x18] sm:$0xff]
  %v19 = vld [vmem:[%s0 + $0x20] sm:$0xff]
  %v20 = vld [vmem:[%s0 + $0x28] sm:$0xff]
  %v21 = vld [vmem:[%s0 + $0x30] sm:$0xff]
  %v22 = vld [vmem:[%s0 + $0x38] sm:$0xff]
  %v23 = vld [vmem:[%s0 + $0x40] sm:$0xff]
  %v24 = vld [vmem:[%s0 + $0x48] sm:$0xff]
  %v25 = vld [vmem:[%s0 + $0x50] sm:$0xff]
  %v26 = vld [vmem:[%s0 + $0x58] sm:$0xff]
  %v27 = vld [vmem:[%s0 + $0x60] sm:$0xff]
  %v28 = vld [vmem:[%s0 + $0x68] sm:$0xff]
  %v29 = vld [vmem:[%s0 + $0x70] sm:$0xff]
  %v30 = vld [vmem:[%s0 + $0x78] sm:$0xff]
  %v31 = vld [vmem:[%s1] sm:$0x1]
  %v33 = vlaneseq
  %v34 = vshrl.u32 %v33, 7
  %v35 = vsub.s32 0, %v34
  %v36 = vrot.slane %v31, %v35
  %38 = vmatprep.subr.mxu0 0.0
  %39 = vmatpush1.msra.mxu0 %v15
  %40 = vmatprep.subr.mxu0 0.0
  %41 = vmatpush1.msra.mxu0 %v16
  %42 = vmatprep.subr.mxu0 0.0
  %43 = vmatpush1.msra.mxu0 %v17
  %44 = vmatprep.subr.mxu0 0.0
  %45 = vmatpush1.msra.mxu0 %v18
  %46 = vmatprep.subr.mxu0 0.0
  %47 = vmatpush1.msra.mxu0 %v19
  %48 = vmatprep.subr.mxu0 0.0
  %49 = vmatpush1.msra.mxu0 %v20
  %50 = vmatprep.subr.mxu0 0.0
  %51 = vmatpush1.msra.mxu0 %v21
  %52 = vmatprep.subr.mxu0 0.0
  %53 = vmatpush1.msra.mxu0 %v22
  %54 = vmatprep.subr.mxu0 0.0
  %55 = vmatpush1.msra.mxu0 %v23
  %56 = vmatprep.subr.mxu0 0.0
  %57 = vmatpush1.msra.mxu0 %v24
  %58 = vmatprep.subr.mxu0 0.0
  %59 = vmatpush1.msra.mxu0 %v25
  %60 = vmatprep.subr.mxu0 0.0
  %61 = vmatpush1.msra.mxu0 %v26
  %62 = vmatprep.subr.mxu0 0.0
  %63 = vmatpush1.msra.mxu0 %v27
  %64 = vmatprep.subr.mxu0 0.0
  %65 = vmatpush1.msra.mxu0 %v28
  %66 = vmatprep.subr.mxu0 0.0
  %67 = vmatpush1.msra.mxu0 %v29
  %68 = vmatprep.subr.mxu0 0.0
  %69 = vmatpush1.msra.mxu0 %v30
  %70 = vmatprep.subr.mxu0 0.0
  %71 = vmatpush1.msra.mxu0 0.0
  %72 = vmatprep.subr.mxu0 0.0
  %73 = vmatpush1.msra.mxu0 0.0
  %74 = vmatprep.subr.mxu0 0.0
  %75 = vmatpush1.msra.mxu0 0.0
  %76 = vmatprep.subr.mxu0 0.0
  %77 = vmatpush1.msra.mxu0 0.0
  %78 = vmatprep.subr.mxu0 0.0
  %79 = vmatpush1.msra.mxu0 0.0
  %80 = vmatprep.subr.mxu0 0.0
  %81 = vmatpush1.msra.mxu0 0.0
  %82 = vmatprep.subr.mxu0 0.0
  %83 = vmatpush1.msra.mxu0 0.0
  %84 = vmatprep.subr.mxu0 0.0
  %85 = vmatpush1.msra.mxu0 0.0
  %86 = vmatprep.subr.mxu0 0.0
  %87 = vmatpush1.msra.mxu0 0.0
  %88 = vmatprep.subr.mxu0 0.0
  %89 = vmatpush1.msra.mxu0 0.0
  %90 = vmatprep.subr.mxu0 0.0
  %91 = vmatpush1.msra.mxu0 0.0
  %92 = vmatprep.subr.mxu0 0.0
  %93 = vmatpush1.msra.mxu0 0.0
  %94 = vmatprep.subr.mxu0 0.0
  %95 = vmatpush1.msra.mxu0 0.0
  %96 = vmatprep.subr.mxu0 0.0
  %97 = vmatpush1.msra.mxu0 0.0
  %98 = vmatprep.subr.mxu0 0.0
  %99 = vmatpush1.msra.mxu0 0.0
  %100 = vmatprep.subr.mxu0 0.0
  %101 = vmatpush1.msra.mxu0 0.0
  %102 = vmatprep.mubr.f32.mxu0 0.0
  %103 = vmatmul.mubr.f32.gmra.mrb[0].mxu0 %v14
  %v104 = vpop.f32.mrb[0].mxu0
  %v105 = vadd.f32 %v36, %v104
  %v106 = vpop.f32.mrb[0].mxu0
  %107 = vdwg.mxu0
  %108 = vst [vmem:[%s3] sm:$0xff] %v105
  // Predicated region
  $region14: #{mlp_chain.1} parent=0 // pred_check
    _
  $region15: #{mlp_chain.1} parent=0 // pred_check_branch
    %110 = sbr.rel (0) target = $region17
  $region16: #{mlp_chain.1} parent=0 // pred_region
    _
  $region17: #{mlp_chain.1} parent=0 // pred_fallthru
    _
  // Predicated region
  $region18: #{mlp_chain.1} parent=0 // pred_check
    _
  $region19: #{mlp_chain.1} parent=0 // pred_check_branch
    %112 = sbr.rel (0) target = $region21
  $region20: #{mlp_chain.1} parent=0 // pred_region
    _
  $region21: #{mlp_chain.1} parent=0 // pred_fallthru
    _

</llo_original>
